<compile_context>
chip_gen: v6e
topology: v6e:2x2x1
jax: 0.10.0
libtpu: 0.0.40
codegen_flags: <defaults>
</compile_context>

<pallas_src>
import jax
import jax.numpy as jnp
from jax import lax
from jax.experimental import pallas as pl
from jax.experimental.pallas import tpu as pltpu
import numpy as np


def _birnn_kernel(x_ref, wih_ref, whh_ref, b_ref, out_ref, hn_ref):
    """Fused bidirectional relu-RNN forward (single invocation, no grid).

    x_ref   : (T*B, 2I)  row block t holds [x_t | x_{T-1-t}]
    wih_ref : (2I, 2H)   block-diag(W_ih_fwd^T, W_ih_rev^T)
    whh_ref : (2H, 2H)   block-diag(W_hh_fwd^T, W_hh_rev^T)
    b_ref   : (1, 2H)    [b_ih_f + b_hh_f | b_ih_r + b_hh_r]
    out_ref : (T*B, 2H)  row block t = [h_fwd(t) | h_rev(t)]
    hn_ref  : (2*B, H)   [final fwd hidden ; final rev hidden]
    """
    H2 = whh_ref.shape[0]
    H = H2 // 2
    B = hn_ref.shape[0] // 2
    T = out_ref.shape[0] // B

    # ---- Hoisted bulk input projection (one MXU matmul, bias folded in) ----
    xproj = (
        jnp.dot(x_ref[...], wih_ref[...], preferred_element_type=jnp.float32)
        + b_ref[...]
    )                                        # (T*B, 2H)

    whh = whh_ref[...]                       # (2H, 2H) block-diagonal

    # ---- Peeled t=0 step: h_0 == 0 so first state is just relu(preact) -----
    h = jnp.maximum(xproj[0:B, :], 0.0)      # (B, 2H) = [h_f(0) | h_r(T-1)]
    hs = [h]

    # ---- Fully unrolled fused recurrence: ONE matmul per step --------------
    for t in range(1, T):
        h = jnp.maximum(
            xproj[t * B:(t + 1) * B, :]
            + jnp.dot(h, whh, preferred_element_type=jnp.float32),
            0.0,
        )
        hs.append(h)

    # ---- Epilogue (off the critical path) -----------------------------------
    # Output row block for time s is [fwd half of step s | rev half of step
    # T-1-s] (the reverse half computed at step t belongs to time T-1-t).
    rows = [
        jnp.concatenate([hs[s][:, :H], hs[T - 1 - s][:, H:]], axis=1)
        for s in range(T)
    ]
    out_ref[...] = jnp.concatenate(rows, axis=0).astype(out_ref.dtype)

    # Final hidden states: fwd half of last step (time T-1) and rev half of
    # last step (time 0), written with a single combined store.
    h_last = hs[T - 1]
    hn_ref[...] = jnp.concatenate(
        [h_last[:, :H], h_last[:, H:]], axis=0
    ).astype(hn_ref.dtype)


def rnn_bidirectional_pallas(x, w_ih, w_hh, b_ih, b_hh):
    """x: (T, B, I); w_ih/w_hh: (2, H, I)/(2, H, H); b_ih/b_hh: (2, H).

    Returns (output (T, B, 2H), h_n (2, B, H)), matching torch.nn.RNN
    (relu, bidirectional, num_layers=1, zero initial hidden state).
    """
    T, B, I = x.shape
    H = w_hh.shape[-1]

    # Forward rows in time order; reverse rows time-flipped so that row block
    # t of the concatenated input is [x_t | x_{T-1-t}].
    x_f = x.reshape(T * B, I).astype(jnp.float32)
    x_r = x[::-1].reshape(T * B, I).astype(jnp.float32)
    x_cat = jnp.concatenate([x_f, x_r], axis=1)                 # (T*B, 2I)

    # Block-diagonal weights so both directions share one matmul per step.
    wih_f = jnp.transpose(w_ih[0]).astype(jnp.float32)          # (I, H)
    wih_r = jnp.transpose(w_ih[1]).astype(jnp.float32)
    zI = jnp.zeros((I, H), jnp.float32)
    wih_blk = jnp.concatenate(
        [jnp.concatenate([wih_f, zI], axis=1),
         jnp.concatenate([zI, wih_r], axis=1)], axis=0)         # (2I, 2H)

    whh_f = jnp.transpose(w_hh[0]).astype(jnp.float32)          # (H, H)
    whh_r = jnp.transpose(w_hh[1]).astype(jnp.float32)
    zH = jnp.zeros((H, H), jnp.float32)
    whh_blk = jnp.concatenate(
        [jnp.concatenate([whh_f, zH], axis=1),
         jnp.concatenate([zH, whh_r], axis=1)], axis=0)         # (2H, 2H)

    b_cat = (b_ih + b_hh).astype(jnp.float32).reshape(1, 2 * H)  # [b_f | b_r]

    vmem = pl.BlockSpec(memory_space=pltpu.MemorySpace.VMEM)
    out2d, hn2d = pl.pallas_call(
        _birnn_kernel,
        out_shape=(
            jax.ShapeDtypeStruct((T * B, 2 * H), jnp.float32),
            jax.ShapeDtypeStruct((2 * B, H), jnp.float32),
        ),
        in_specs=[vmem, vmem, vmem, vmem],
        out_specs=(vmem, vmem),
    )(x_cat, wih_blk, whh_blk, b_cat)

    # Metadata-only reshapes in the wrapper.
    output = out2d.reshape(T, B, 2 * H)
    h_n = hn2d.reshape(2, B, H)
    return output, h_n


def _rnn_reference(x, w_ih, w_hh, b_ih, b_hh):
    """Pure-JAX reference for correctness checking."""
    T, B, _ = x.shape
    H = w_hh.shape[-1]

    def run_dir(xs, wih, whh, b):
        def step(h, xt):
            h = jnp.maximum(xt @ wih.T + h @ whh.T + b, 0.0)
            return h, h
        h_last, hs = lax.scan(step, jnp.zeros((B, H), jnp.float32), xs)
        return hs, h_last

    hs_f, hf = run_dir(x, w_ih[0], w_hh[0], b_ih[0] + b_hh[0])
    hs_b, hb = run_dir(x[::-1], w_ih[1], w_hh[1], b_ih[1] + b_hh[1])
    hs_b = hs_b[::-1]
    out = jnp.concatenate([hs_f, hs_b], axis=-1)
    h_n = jnp.stack([hf, hb], axis=0)
    return out, h_n


if __name__ == "__main__":
    T, B, I, H = 8, 2, 4, 4

    key = jax.random.PRNGKey(0)
    kx, k1, k2, k3, k4 = jax.random.split(key, 5)

    # Deterministic parameter init (PyTorch uses U(-1/sqrt(H), 1/sqrt(H)))
    bound = 1.0 / np.sqrt(H)
    x = jax.random.normal(kx, (T, B, I), dtype=jnp.float32)
    w_ih = jax.random.uniform(k1, (2, H, I), jnp.float32, -bound, bound)
    w_hh = jax.random.uniform(k2, (2, H, H), jnp.float32, -bound, bound)
    b_ih = jax.random.uniform(k3, (2, H), jnp.float32, -bound, bound)
    b_hh = jax.random.uniform(k4, (2, H), jnp.float32, -bound, bound)

    output, h_n = rnn_bidirectional_pallas(x, w_ih, w_hh, b_ih, b_hh)
    jax.block_until_ready((output, h_n))

    ref_out, ref_hn = _rnn_reference(x, w_ih, w_hh, b_ih, b_hh)
    np.testing.assert_allclose(np.asarray(output), np.asarray(ref_out),
                               rtol=1e-5, atol=1e-5)
    np.testing.assert_allclose(np.asarray(h_n), np.asarray(ref_hn),
                               rtol=1e-5, atol=1e-5)

    assert output.shape == (T, B, 2 * H)
    assert h_n.shape == (2, B, H)
    print("KERNEL_OK")
</pallas_src>

<mosaic_0001>
module attributes {stable_mosaic.version = 11 : i64} {
  func.func @_birnn_kernel(%arg0: memref<16x8xf32, #tpu.memory_space<vmem>>, %arg1: memref<8x8xf32, #tpu.memory_space<vmem>>, %arg2: memref<8x8xf32, #tpu.memory_space<vmem>>, %arg3: memref<1x8xf32, #tpu.memory_space<vmem>>, %arg4: memref<16x8xf32, #tpu.memory_space<vmem>>, %arg5: memref<4x4xf32, #tpu.memory_space<vmem>>) attributes {dimension_semantics = [], scalar_prefetch = 0 : i64, scratch_operands = 0 : i64, tpu.core_type = #tpu.core_type<tc>} {
    %c0 = arith.constant 0 : index
    %c0_0 = arith.constant 0 : index
    %0 = vector.load %arg0[%c0, %c0_0] : memref<16x8xf32, #tpu.memory_space<vmem>>, vector<16x8xf32>
    %c0_1 = arith.constant 0 : index
    %c0_2 = arith.constant 0 : index
    %1 = vector.load %arg1[%c0_1, %c0_2] : memref<8x8xf32, #tpu.memory_space<vmem>>, vector<8x8xf32>
    %cst = arith.constant dense<0.000000e+00> : vector<16x8xf32>
    %2 = tpu.matmul %0, %1, %cst {dimension_numbers = #tpu.dot_dimension_numbers<[1], [0], [0], [1], [0, 0, 1, 1], [], []>} : vector<16x8xf32>, vector<8x8xf32>, vector<16x8xf32> -> vector<16x8xf32>
    %c0_3 = arith.constant 0 : index
    %c0_4 = arith.constant 0 : index
    %3 = vector.load %arg3[%c0_3, %c0_4] : memref<1x8xf32, #tpu.memory_space<vmem>>, vector<1x8xf32>
    %4 = vector.broadcast %3 : vector<1x8xf32> to vector<16x8xf32>
    %5 = arith.addf %2, %4 : vector<16x8xf32>
    %c0_5 = arith.constant 0 : index
    %c0_6 = arith.constant 0 : index
    %6 = vector.load %arg2[%c0_5, %c0_6] : memref<8x8xf32, #tpu.memory_space<vmem>>, vector<8x8xf32>
    %7 = vector.extract_strided_slice %5 {offsets = [0, 0], sizes = [2, 8], strides = [1, 1]} : vector<16x8xf32> to vector<2x8xf32>
    %cst_7 = arith.constant 0.000000e+00 : f32
    %8 = vector.broadcast %cst_7 : f32 to vector<2x8xf32>
    %9 = arith.maximumf %7, %8 : vector<2x8xf32>
    %10 = vector.extract_strided_slice %5 {offsets = [2, 0], sizes = [2, 8], strides = [1, 1]} : vector<16x8xf32> to vector<2x8xf32>
    %cst_8 = arith.constant dense<0.000000e+00> : vector<2x8xf32>
    %11 = tpu.matmul %9, %6, %cst_8 {dimension_numbers = #tpu.dot_dimension_numbers<[1], [0], [0], [1], [0, 0, 1, 1], [], []>} : vector<2x8xf32>, vector<8x8xf32>, vector<2x8xf32> -> vector<2x8xf32>
    %12 = arith.addf %10, %11 : vector<2x8xf32>
    %cst_9 = arith.constant 0.000000e+00 : f32
    %13 = vector.broadcast %cst_9 : f32 to vector<2x8xf32>
    %14 = arith.maximumf %12, %13 : vector<2x8xf32>
    %15 = vector.extract_strided_slice %5 {offsets = [4, 0], sizes = [2, 8], strides = [1, 1]} : vector<16x8xf32> to vector<2x8xf32>
    %cst_10 = arith.constant dense<0.000000e+00> : vector<2x8xf32>
    %16 = tpu.matmul %14, %6, %cst_10 {dimension_numbers = #tpu.dot_dimension_numbers<[1], [0], [0], [1], [0, 0, 1, 1], [], []>} : vector<2x8xf32>, vector<8x8xf32>, vector<2x8xf32> -> vector<2x8xf32>
    %17 = arith.addf %15, %16 : vector<2x8xf32>
    %cst_11 = arith.constant 0.000000e+00 : f32
    %18 = vector.broadcast %cst_11 : f32 to vector<2x8xf32>
    %19 = arith.maximumf %17, %18 : vector<2x8xf32>
    %20 = vector.extract_strided_slice %5 {offsets = [6, 0], sizes = [2, 8], strides = [1, 1]} : vector<16x8xf32> to vector<2x8xf32>
    %cst_12 = arith.constant dense<0.000000e+00> : vector<2x8xf32>
    %21 = tpu.matmul %19, %6, %cst_12 {dimension_numbers = #tpu.dot_dimension_numbers<[1], [0], [0], [1], [0, 0, 1, 1], [], []>} : vector<2x8xf32>, vector<8x8xf32>, vector<2x8xf32> -> vector<2x8xf32>
    %22 = arith.addf %20, %21 : vector<2x8xf32>
    %cst_13 = arith.constant 0.000000e+00 : f32
    %23 = vector.broadcast %cst_13 : f32 to vector<2x8xf32>
    %24 = arith.maximumf %22, %23 : vector<2x8xf32>
    %25 = vector.extract_strided_slice %5 {offsets = [8, 0], sizes = [2, 8], strides = [1, 1]} : vector<16x8xf32> to vector<2x8xf32>
    %cst_14 = arith.constant dense<0.000000e+00> : vector<2x8xf32>
    %26 = tpu.matmul %24, %6, %cst_14 {dimension_numbers = #tpu.dot_dimension_numbers<[1], [0], [0], [1], [0, 0, 1, 1], [], []>} : vector<2x8xf32>, vector<8x8xf32>, vector<2x8xf32> -> vector<2x8xf32>
    %27 = arith.addf %25, %26 : vector<2x8xf32>
    %cst_15 = arith.constant 0.000000e+00 : f32
    %28 = vector.broadcast %cst_15 : f32 to vector<2x8xf32>
    %29 = arith.maximumf %27, %28 : vector<2x8xf32>
    %30 = vector.extract_strided_slice %5 {offsets = [10, 0], sizes = [2, 8], strides = [1, 1]} : vector<16x8xf32> to vector<2x8xf32>
    %cst_16 = arith.constant dense<0.000000e+00> : vector<2x8xf32>
    %31 = tpu.matmul %29, %6, %cst_16 {dimension_numbers = #tpu.dot_dimension_numbers<[1], [0], [0], [1], [0, 0, 1, 1], [], []>} : vector<2x8xf32>, vector<8x8xf32>, vector<2x8xf32> -> vector<2x8xf32>
    %32 = arith.addf %30, %31 : vector<2x8xf32>
    %cst_17 = arith.constant 0.000000e+00 : f32
    %33 = vector.broadcast %cst_17 : f32 to vector<2x8xf32>
    %34 = arith.maximumf %32, %33 : vector<2x8xf32>
    %35 = vector.extract_strided_slice %5 {offsets = [12, 0], sizes = [2, 8], strides = [1, 1]} : vector<16x8xf32> to vector<2x8xf32>
    %cst_18 = arith.constant dense<0.000000e+00> : vector<2x8xf32>
    %36 = tpu.matmul %34, %6, %cst_18 {dimension_numbers = #tpu.dot_dimension_numbers<[1], [0], [0], [1], [0, 0, 1, 1], [], []>} : vector<2x8xf32>, vector<8x8xf32>, vector<2x8xf32> -> vector<2x8xf32>
    %37 = arith.addf %35, %36 : vector<2x8xf32>
    %cst_19 = arith.constant 0.000000e+00 : f32
    %38 = vector.broadcast %cst_19 : f32 to vector<2x8xf32>
    %39 = arith.maximumf %37, %38 : vector<2x8xf32>
    %40 = vector.extract_strided_slice %5 {offsets = [14, 0], sizes = [2, 8], strides = [1, 1]} : vector<16x8xf32> to vector<2x8xf32>
    %cst_20 = arith.constant dense<0.000000e+00> : vector<2x8xf32>
    %41 = tpu.matmul %39, %6, %cst_20 {dimension_numbers = #tpu.dot_dimension_numbers<[1], [0], [0], [1], [0, 0, 1, 1], [], []>} : vector<2x8xf32>, vector<8x8xf32>, vector<2x8xf32> -> vector<2x8xf32>
    %42 = arith.addf %40, %41 : vector<2x8xf32>
    %cst_21 = arith.constant 0.000000e+00 : f32
    %43 = vector.broadcast %cst_21 : f32 to vector<2x8xf32>
    %44 = arith.maximumf %42, %43 : vector<2x8xf32>
    %45 = vector.extract_strided_slice %9 {offsets = [0, 0], sizes = [2, 4], strides = [1, 1]} : vector<2x8xf32> to vector<2x4xf32>
    %46 = vector.extract_strided_slice %44 {offsets = [0, 4], sizes = [2, 4], strides = [1, 1]} : vector<2x8xf32> to vector<2x4xf32>
    %47 = tpu.concatenate %45, %46 in 1 : vector<2x4xf32>, vector<2x4xf32> -> vector<2x8xf32>
    %48 = vector.extract_strided_slice %14 {offsets = [0, 0], sizes = [2, 4], strides = [1, 1]} : vector<2x8xf32> to vector<2x4xf32>
    %49 = vector.extract_strided_slice %39 {offsets = [0, 4], sizes = [2, 4], strides = [1, 1]} : vector<2x8xf32> to vector<2x4xf32>
    %50 = tpu.concatenate %48, %49 in 1 : vector<2x4xf32>, vector<2x4xf32> -> vector<2x8xf32>
    %51 = vector.extract_strided_slice %19 {offsets = [0, 0], sizes = [2, 4], strides = [1, 1]} : vector<2x8xf32> to vector<2x4xf32>
    %52 = vector.extract_strided_slice %34 {offsets = [0, 4], sizes = [2, 4], strides = [1, 1]} : vector<2x8xf32> to vector<2x4xf32>
    %53 = tpu.concatenate %51, %52 in 1 : vector<2x4xf32>, vector<2x4xf32> -> vector<2x8xf32>
    %54 = vector.extract_strided_slice %24 {offsets = [0, 0], sizes = [2, 4], strides = [1, 1]} : vector<2x8xf32> to vector<2x4xf32>
    %55 = vector.extract_strided_slice %29 {offsets = [0, 4], sizes = [2, 4], strides = [1, 1]} : vector<2x8xf32> to vector<2x4xf32>
    %56 = tpu.concatenate %54, %55 in 1 : vector<2x4xf32>, vector<2x4xf32> -> vector<2x8xf32>
    %57 = vector.extract_strided_slice %29 {offsets = [0, 0], sizes = [2, 4], strides = [1, 1]} : vector<2x8xf32> to vector<2x4xf32>
    %58 = vector.extract_strided_slice %24 {offsets = [0, 4], sizes = [2, 4], strides = [1, 1]} : vector<2x8xf32> to vector<2x4xf32>
    %59 = tpu.concatenate %57, %58 in 1 : vector<2x4xf32>, vector<2x4xf32> -> vector<2x8xf32>
    %60 = vector.extract_strided_slice %34 {offsets = [0, 0], sizes = [2, 4], strides = [1, 1]} : vector<2x8xf32> to vector<2x4xf32>
    %61 = vector.extract_strided_slice %19 {offsets = [0, 4], sizes = [2, 4], strides = [1, 1]} : vector<2x8xf32> to vector<2x4xf32>
    %62 = tpu.concatenate %60, %61 in 1 : vector<2x4xf32>, vector<2x4xf32> -> vector<2x8xf32>
    %63 = vector.extract_strided_slice %39 {offsets = [0, 0], sizes = [2, 4], strides = [1, 1]} : vector<2x8xf32> to vector<2x4xf32>
    %64 = vector.extract_strided_slice %14 {offsets = [0, 4], sizes = [2, 4], strides = [1, 1]} : vector<2x8xf32> to vector<2x4xf32>
    %65 = tpu.concatenate %63, %64 in 1 : vector<2x4xf32>, vector<2x4xf32> -> vector<2x8xf32>
    %66 = vector.extract_strided_slice %44 {offsets = [0, 0], sizes = [2, 4], strides = [1, 1]} : vector<2x8xf32> to vector<2x4xf32>
    %67 = vector.extract_strided_slice %9 {offsets = [0, 4], sizes = [2, 4], strides = [1, 1]} : vector<2x8xf32> to vector<2x4xf32>
    %68 = tpu.concatenate %66, %67 in 1 : vector<2x4xf32>, vector<2x4xf32> -> vector<2x8xf32>
    %69 = tpu.concatenate %47, %50, %53, %56, %59, %62, %65, %68 in 0 : vector<2x8xf32>, vector<2x8xf32>, vector<2x8xf32>, vector<2x8xf32>, vector<2x8xf32>, vector<2x8xf32>, vector<2x8xf32>, vector<2x8xf32> -> vector<16x8xf32>
    %c0_22 = arith.constant 0 : index
    %c0_23 = arith.constant 0 : index
    %70 = vector.load %arg4[%c0_22, %c0_23] : memref<16x8xf32, #tpu.memory_space<vmem>>, vector<16x8xf32>
    tpu.vector_store %arg4[%c0_22, %c0_23], %69 {strides = array<i32>} : memref<16x8xf32, #tpu.memory_space<vmem>>, vector<16x8xf32>,
    %71 = vector.extract_strided_slice %44 {offsets = [0, 0], sizes = [2, 4], strides = [1, 1]} : vector<2x8xf32> to vector<2x4xf32>
    %72 = vector.extract_strided_slice %44 {offsets = [0, 4], sizes = [2, 4], strides = [1, 1]} : vector<2x8xf32> to vector<2x4xf32>
    %73 = tpu.concatenate %71, %72 in 0 : vector<2x4xf32>, vector<2x4xf32> -> vector<4x4xf32>
    %c0_24 = arith.constant 0 : index
    %c0_25 = arith.constant 0 : index
    %74 = vector.load %arg5[%c0_24, %c0_25] : memref<4x4xf32, #tpu.memory_space<vmem>>, vector<4x4xf32>
    tpu.vector_store %arg5[%c0_24, %c0_25], %73 {strides = array<i32>} : memref<4x4xf32, #tpu.memory_space<vmem>>, vector<4x4xf32>,
    return
  }
}

</mosaic_0001>

<llo_original>
// kernel: tpu_custom_call.1
$region0: #{tpu_custom_call.1}
  #allocation0 [shape = 'u32[]', space=smem, size = 0x4, offset = 0x4, fixed_abs, tag = 'smem constant byte address 0x4 - core index']
  #allocation1 [shape = 'u32[144,128]{1,0:T(1,128)}', space=vmem, size = 0x12000, scoped, tag = 'internal scratch']
  %s0 = inlined_call_operand.vmem [shape: f32[16,8], index: 0, kind: input, shape index: {}]
  %s1 = inlined_call_operand.vmem [shape: f32[8,8], index: 1, kind: input, shape index: {}]
  %s2 = inlined_call_operand.vmem [shape: f32[8,8], index: 2, kind: input, shape index: {}]
  %s3 = inlined_call_operand.vmem [shape: f32[1,8], index: 3, kind: input, shape index: {}]
  %s4 = inlined_call_operand.vmem [shape: f32[16,8], index: 4, kind: output, shape index: {0}]
  %s5 = inlined_call_operand.hbm [shape: f32[4,4], index: 5, kind: output, shape index: {1}]
  %6 = xla_tuple %s4, %s5
  %s7 = sld [smem:[#allocation0]]
  $region34: #{tpu_custom_call.1} parent=0
    _
  %s9 = ssub.s32 1, %s7
  %s10 = scalar_select 0, %s9, %s7
  $region1: #{tpu_custom_call.1} parent=0
    #allocation2 [shape = 'u8[2048]{0}', space=vmem, size = 0x800, scoped, tag = 'output window, operand 1, single buffered']
    #allocation3 [shape = 's32[1]{0}', space=sflag, size = 0x4, scoped, tag = 'scoped memory for tpu_custom_call.1']
    %11 = vsyncpa [#allocation3], 0
    // Predicated region
    $region2: #{tpu_custom_call.1} parent=1 // pred_check
      _
    $region3: #{tpu_custom_call.1} parent=1 // pred_check_branch
      %13 = sbr.rel (0) target = $region5
    $region4: #{tpu_custom_call.1} parent=1 // pred_region
      _
    $region5: #{tpu_custom_call.1} parent=1 // pred_fallthru
      _
    // Predicated region
    $region6: #{tpu_custom_call.1} parent=1 // pred_check
      _
    $region7: #{tpu_custom_call.1} parent=1 // pred_check_branch
      %15 = sbr.rel (0) target = $region9
    $region8: #{tpu_custom_call.1} parent=1 // pred_region
      _
    $region9: #{tpu_custom_call.1} parent=1 // pred_fallthru
      _
    // Predicated region
    $region10: #{tpu_custom_call.1} parent=1 // pred_check
      _
    $region11: #{tpu_custom_call.1} parent=1 // pred_check_branch
      %17 = sbr.rel (0) target = $region13
    $region12: #{tpu_custom_call.1} parent=1 // pred_region
      _
    $region13: #{tpu_custom_call.1} parent=1 // pred_fallthru
      _
    // Predicated region
    $region14: #{tpu_custom_call.1} parent=1 // pred_check
      _
    $region15: #{tpu_custom_call.1} parent=1 // pred_check_branch
      %19 = sbr.rel (0) target = $region17
    $region16: #{tpu_custom_call.1} parent=1 // pred_region
      _
    $region17: #{tpu_custom_call.1} parent=1 // pred_fallthru
      _
    %v20 = vld [vmem:[%s0] sm:$0xff]
    %v21 = vld [vmem:[%s0 + $0x8] sm:$0xff]
    %v22 = vld [vmem:[%s1] sm:$0xff]
    %v23 = vld [vmem:[%s3] sm:$0x1]
    %v25 = vlaneseq
    %v26 = vshrl.u32 %v25, 7
    %v27 = vsub.s32 0, %v26
    %v28 = vrot.slane %v23, %v27
    %vm30 = vcmask 64512
    %v32 = vsel %vm30, %v20, 0
    %v35 = vsel %vm30, %v21, 0
    %37 = vmatprep.subr.mxu0 0.0
    %38 = vmatpush1.msra.mxu0 0.0
    %39 = vmatprep.subr.mxu0 0.0
    %40 = vmatpush1.msra.mxu0 0.0
    %41 = vmatprep.subr.mxu0 0.0
    %42 = vmatpush1.msra.mxu0 0.0
    %43 = vmatprep.subr.mxu0 0.0
    %44 = vmatpush1.msra.mxu0 0.0
    %45 = vmatprep.subr.mxu0 0.0
    %46 = vmatpush1.msra.mxu0 0.0
    %47 = vmatprep.subr.mxu0 0.0
    %48 = vmatpush1.msra.mxu0 0.0
    %49 = vmatprep.subr.mxu0 0.0
    %50 = vmatpush1.msra.mxu0 0.0
    %51 = vmatprep.subr.mxu0 0.0
    %52 = vmatpush1.msra.mxu0 0.0
    %53 = vmatprep.subr.mxu0 0.0
    %54 = vmatpush1.msra.mxu0 0.0
    %55 = vmatprep.subr.mxu0 0.0
    %56 = vmatpush1.msra.mxu0 0.0
    %57 = vmatprep.subr.mxu0 0.0
    %58 = vmatpush1.msra.mxu0 0.0
    %59 = vmatprep.subr.mxu0 0.0
    %60 = vmatpush1.msra.mxu0 0.0
    %61 = vmatprep.subr.mxu0 0.0
    %62 = vmatpush1.msra.mxu0 0.0
    %63 = vmatprep.subr.mxu0 0.0
    %64 = vmatpush1.msra.mxu0 0.0
    %65 = vmatprep.subr.mxu0 0.0
    %66 = vmatpush1.msra.mxu0 0.0
    %67 = vmatprep.subr.mxu0 0.0
    %68 = vmatpush1.msra.mxu0 %v22
    %69 = vmatprep.subr.mxu0 0.0
    %70 = vmatpush2.msra.mxu0 0.0
    %71 = vmatprep.subr.mxu0 0.0
    %72 = vmatpush2.msra.mxu0 0.0
    %73 = vmatprep.subr.mxu0 0.0
    %74 = vmatpush2.msra.mxu0 0.0
    %75 = vmatprep.subr.mxu0 0.0
    %76 = vmatpush2.msra.mxu0 0.0
    %77 = vmatprep.subr.mxu0 0.0
    %78 = vmatpush2.msra.mxu0 0.0
    %79 = vmatprep.subr.mxu0 0.0
    %80 = vmatpush2.msra.mxu0 0.0
    %81 = vmatprep.subr.mxu0 0.0
    %82 = vmatpush2.msra.mxu0 0.0
    %83 = vmatprep.subr.mxu0 0.0
    %84 = vmatpush2.msra.mxu0 0.0
    %85 = vmatprep.subr.mxu0 0.0
    %86 = vmatpush2.msra.mxu0 0.0
    %87 = vmatprep.subr.mxu0 0.0
    %88 = vmatpush2.msra.mxu0 0.0
    %89 = vmatprep.subr.mxu0 0.0
    %90 = vmatpush2.msra.mxu0 0.0
    %91 = vmatprep.subr.mxu0 0.0
    %92 = vmatpush2.msra.mxu0 0.0
    %93 = vmatprep.subr.mxu0 0.0
    %94 = vmatpush2.msra.mxu0 0.0
    %95 = vmatprep.subr.mxu0 0.0
    %96 = vmatpush2.msra.mxu0 0.0
    %97 = vmatprep.subr.mxu0 0.0
    %98 = vmatpush2.msra.mxu0 0.0
    %99 = vmatprep.subr.mxu0 0.0
    %100 = vmatpush2.msra.mxu0 0.0
    %101 = vmatprep.mubr.f32.mxu0 0.0
    %102 = vmatmul.mubr.f32.gmra.mxu0 %v32
    %v103 = vpop.f32.mrf.mxu0
    %v104 = vadd.f32 %v28, %v103
    %v105 = vpop.f32.mrf.mxu0
    %106 = vmatprep.mubr.f32.mxu0 0.0
    %107 = vmatmul.mubr.f32.gmra.mxu0 %v35
    %v108 = vpop.f32.mrf.mxu0
    %v109 = vadd.f32 %v28, %v108
    %v110 = vpop.f32.mrf.mxu0
    %111 = vdwg.mxu0
    %v112 = vld [vmem:[%s2] sm:$0xff]
    %v113 = vmax.f32 %v104, 0.0
    %v115 = vsel %vm30, %v113, 0
    %117 = vmatprep.subr.mxu0 0.0
    %118 = vmatpush1.msra.mxu0 0.0
    %119 = vmatprep.subr.mxu0 0.0
    %120 = vmatpush1.msra.mxu0 0.0
    %121 = vmatprep.subr.mxu0 0.0
    %122 = vmatpush1.msra.mxu0 0.0
    %123 = vmatprep.subr.mxu0 0.0
    %124 = vmatpush1.msra.mxu0 0.0
    %125 = vmatprep.subr.mxu0 0.0
    %126 = vmatpush1.msra.mxu0 0.0
    %127 = vmatprep.subr.mxu0 0.0
    %128 = vmatpush1.msra.mxu0 0.0
    %129 = vmatprep.subr.mxu0 0.0
    %130 = vmatpush1.msra.mxu0 0.0
    %131 = vmatprep.subr.mxu0 0.0
    %132 = vmatpush1.msra.mxu0 0.0
    %133 = vmatprep.subr.mxu0 0.0
    %134 = vmatpush1.msra.mxu0 0.0
    %135 = vmatprep.subr.mxu0 0.0
    %136 = vmatpush1.msra.mxu0 0.0
    %137 = vmatprep.subr.mxu0 0.0
    %138 = vmatpush1.msra.mxu0 0.0
    %139 = vmatprep.subr.mxu0 0.0
    %140 = vmatpush1.msra.mxu0 0.0
    %141 = vmatprep.subr.mxu0 0.0
    %142 = vmatpush1.msra.mxu0 0.0
    %143 = vmatprep.subr.mxu0 0.0
    %144 = vmatpush1.msra.mxu0 0.0
    %145 = vmatprep.subr.mxu0 0.0
    %146 = vmatpush1.msra.mxu0 0.0
    %147 = vmatprep.subr.mxu0 0.0
    %148 = vmatpush1.msra.mxu0 %v112
    %149 = vmatprep.subr.mxu0 0.0
    %150 = vmatpush2.msra.mxu0 0.0
    %151 = vmatprep.subr.mxu0 0.0
    %152 = vmatpush2.msra.mxu0 0.0
    %153 = vmatprep.subr.mxu0 0.0
    %154 = vmatpush2.msra.mxu0 0.0
    %155 = vmatprep.subr.mxu0 0.0
    %156 = vmatpush2.msra.mxu0 0.0
    %157 = vmatprep.subr.mxu0 0.0
    %158 = vmatpush2.msra.mxu0 0.0
    %159 = vmatprep.subr.mxu0 0.0
    %160 = vmatpush2.msra.mxu0 0.0
    %161 = vmatprep.subr.mxu0 0.0
    %162 = vmatpush2.msra.mxu0 0.0
    %163 = vmatprep.subr.mxu0 0.0
    %164 = vmatpush2.msra.mxu0 0.0
    %165 = vmatprep.subr.mxu0 0.0
    %166 = vmatpush2.msra.mxu0 0.0
    %167 = vmatprep.subr.mxu0 0.0
    %168 = vmatpush2.msra.mxu0 0.0
    %169 = vmatprep.subr.mxu0 0.0
    %170 = vmatpush2.msra.mxu0 0.0
    %171 = vmatprep.subr.mxu0 0.0
    %172 = vmatpush2.msra.mxu0 0.0
    %173 = vmatprep.subr.mxu0 0.0
    %174 = vmatpush2.msra.mxu0 0.0
    %175 = vmatprep.subr.mxu0 0.0
    %176 = vmatpush2.msra.mxu0 0.0
    %177 = vmatprep.subr.mxu0 0.0
    %178 = vmatpush2.msra.mxu0 0.0
    %179 = vmatprep.subr.mxu0 0.0
    %180 = vmatpush2.msra.mxu0 0.0
    %181 = vmatprep.mubr.f32.mxu0 0.0
    %182 = vmatmul.mubr.f32.gmra.mxu0 %v115
    %v183 = vpop.f32.mrf.mxu0
    %v184 = vadd.f32 0.0, %v183
    %v185 = vpop.f32.mrf.mxu0
    %186 = vdwg.mxu0
    %v188 = vrot.slane %v184, 6
    %v190 = vadd.f32 %v104, %v188
    %v191 = vmax.f32 %v190, 0.0
    %v193 = vrot.slane %v191, 2
    %v194 = vsel %vm30, %v193, 0
    %196 = vmatprep.subr.mxu0 0.0
    %197 = vmatpush1.msra.mxu0 0.0
    %198 = vmatprep.subr.mxu0 0.0
    %199 = vmatpush1.msra.mxu0 0.0
    %200 = vmatprep.subr.mxu0 0.0
    %201 = vmatpush1.msra.mxu0 0.0
    %202 = vmatprep.subr.mxu0 0.0
    %203 = vmatpush1.msra.mxu0 0.0
    %204 = vmatprep.subr.mxu0 0.0
    %205 = vmatpush1.msra.mxu0 0.0
    %206 = vmatprep.subr.mxu0 0.0
    %207 = vmatpush1.msra.mxu0 0.0
    %208 = vmatprep.subr.mxu0 0.0
    %209 = vmatpush1.msra.mxu0 0.0
    %210 = vmatprep.subr.mxu0 0.0
    %211 = vmatpush1.msra.mxu0 0.0
    %212 = vmatprep.subr.mxu0 0.0
    %213 = vmatpush1.msra.mxu0 0.0
    %214 = vmatprep.subr.mxu0 0.0
    %215 = vmatpush1.msra.mxu0 0.0
    %216 = vmatprep.subr.mxu0 0.0
    %217 = vmatpush1.msra.mxu0 0.0
    %218 = vmatprep.subr.mxu0 0.0
    %219 = vmatpush1.msra.mxu0 0.0
    %220 = vmatprep.subr.mxu0 0.0
    %221 = vmatpush1.msra.mxu0 0.0
    %222 = vmatprep.subr.mxu0 0.0
    %223 = vmatpush1.msra.mxu0 0.0
    %224 = vmatprep.subr.mxu0 0.0
    %225 = vmatpush1.msra.mxu0 0.0
    %226 = vmatprep.subr.mxu0 0.0
    %227 = vmatpush1.msra.mxu0 %v112
    %228 = vmatprep.subr.mxu0 0.0
    %229 = vmatpush2.msra.mxu0 0.0
    %230 = vmatprep.subr.mxu0 0.0
    %231 = vmatpush2.msra.mxu0 0.0
    %232 = vmatprep.subr.mxu0 0.0
    %233 = vmatpush2.msra.mxu0 0.0
    %234 = vmatprep.subr.mxu0 0.0
    %235 = vmatpush2.msra.mxu0 0.0
    %236 = vmatprep.subr.mxu0 0.0
    %237 = vmatpush2.msra.mxu0 0.0
    %238 = vmatprep.subr.mxu0 0.0
    %239 = vmatpush2.msra.mxu0 0.0
    %240 = vmatprep.subr.mxu0 0.0
    %241 = vmatpush2.msra.mxu0 0.0
    %242 = vmatprep.subr.mxu0 0.0
    %243 = vmatpush2.msra.mxu0 0.0
    %244 = vmatprep.subr.mxu0 0.0
    %245 = vmatpush2.msra.mxu0 0.0
    %246 = vmatprep.subr.mxu0 0.0
    %247 = vmatpush2.msra.mxu0 0.0
    %248 = vmatprep.subr.mxu0 0.0
    %249 = vmatpush2.msra.mxu0 0.0
    %250 = vmatprep.subr.mxu0 0.0
    %251 = vmatpush2.msra.mxu0 0.0
    %252 = vmatprep.subr.mxu0 0.0
    %253 = vmatpush2.msra.mxu0 0.0
    %254 = vmatprep.subr.mxu0 0.0
    %255 = vmatpush2.msra.mxu0 0.0
    %256 = vmatprep.subr.mxu0 0.0
    %257 = vmatpush2.msra.mxu0 0.0
    %258 = vmatprep.subr.mxu0 0.0
    %259 = vmatpush2.msra.mxu0 0.0
    %260 = vmatprep.mubr.f32.mxu0 0.0
    %261 = vmatmul.mubr.f32.gmra.mxu0 %v194
    %v262 = vpop.f32.mrf.mxu0
    %v263 = vadd.f32 0.0, %v262
    %v264 = vpop.f32.mrf.mxu0
    %265 = vdwg.mxu0
    %v267 = vrot.slane %v263, 4
    %v269 = vadd.f32 %v104, %v267
    %v270 = vmax.f32 %v269, 0.0
    %v272 = vrot.slane %v270, 4
    %v273 = vsel %vm30, %v272, 0
    %275 = vmatprep.subr.mxu0 0.0
    %276 = vmatpush1.msra.mxu0 0.0
    %277 = vmatprep.subr.mxu0 0.0
    %278 = vmatpush1.msra.mxu0 0.0
    %279 = vmatprep.subr.mxu0 0.0
    %280 = vmatpush1.msra.mxu0 0.0
    %281 = vmatprep.subr.mxu0 0.0
    %282 = vmatpush1.msra.mxu0 0.0
    %283 = vmatprep.subr.mxu0 0.0
    %284 = vmatpush1.msra.mxu0 0.0
    %285 = vmatprep.subr.mxu0 0.0
    %286 = vmatpush1.msra.mxu0 0.0
    %287 = vmatprep.subr.mxu0 0.0
    %288 = vmatpush1.msra.mxu0 0.0
    %289 = vmatprep.subr.mxu0 0.0
    %290 = vmatpush1.msra.mxu0 0.0
    %291 = vmatprep.subr.mxu0 0.0
    %292 = vmatpush1.msra.mxu0 0.0
    %293 = vmatprep.subr.mxu0 0.0
    %294 = vmatpush1.msra.mxu0 0.0
    %295 = vmatprep.subr.mxu0 0.0
    %296 = vmatpush1.msra.mxu0 0.0
    %297 = vmatprep.subr.mxu0 0.0
    %298 = vmatpush1.msra.mxu0 0.0
    %299 = vmatprep.subr.mxu0 0.0
    %300 = vmatpush1.msra.mxu0 0.0
    %301 = vmatprep.subr.mxu0 0.0
    %302 = vmatpush1.msra.mxu0 0.0
    %303 = vmatprep.subr.mxu0 0.0
    %304 = vmatpush1.msra.mxu0 0.0
    %305 = vmatprep.subr.mxu0 0.0
    %306 = vmatpush1.msra.mxu0 %v112
    %307 = vmatprep.subr.mxu0 0.0
    %308 = vmatpush2.msra.mxu0 0.0
    %309 = vmatprep.subr.mxu0 0.0
    %310 = vmatpush2.msra.mxu0 0.0
    %311 = vmatprep.subr.mxu0 0.0
    %312 = vmatpush2.msra.mxu0 0.0
    %313 = vmatprep.subr.mxu0 0.0
    %314 = vmatpush2.msra.mxu0 0.0
    %315 = vmatprep.subr.mxu0 0.0
    %316 = vmatpush2.msra.mxu0 0.0
    %317 = vmatprep.subr.mxu0 0.0
    %318 = vmatpush2.msra.mxu0 0.0
    %319 = vmatprep.subr.mxu0 0.0
    %320 = vmatpush2.msra.mxu0 0.0
    %321 = vmatprep.subr.mxu0 0.0
    %322 = vmatpush2.msra.mxu0 0.0
    %323 = vmatprep.subr.mxu0 0.0
    %324 = vmatpush2.msra.mxu0 0.0
    %325 = vmatprep.subr.mxu0 0.0
    %326 = vmatpush2.msra.mxu0 0.0
    %327 = vmatprep.subr.mxu0 0.0
    %328 = vmatpush2.msra.mxu0 0.0
    %329 = vmatprep.subr.mxu0 0.0
    %330 = vmatpush2.msra.mxu0 0.0
    %331 = vmatprep.subr.mxu0 0.0
    %332 = vmatpush2.msra.mxu0 0.0
    %333 = vmatprep.subr.mxu0 0.0
    %334 = vmatpush2.msra.mxu0 0.0
    %335 = vmatprep.subr.mxu0 0.0
    %336 = vmatpush2.msra.mxu0 0.0
    %337 = vmatprep.subr.mxu0 0.0
    %338 = vmatpush2.msra.mxu0 0.0
    %339 = vmatprep.mubr.f32.mxu0 0.0
    %340 = vmatmul.mubr.f32.gmra.mxu0 %v273
    %v341 = vpop.f32.mrf.mxu0
    %v342 = vadd.f32 0.0, %v341
    %v343 = vpop.f32.mrf.mxu0
    %344 = vdwg.mxu0
    %v346 = vrot.slane %v342, 2
    %v348 = vadd.f32 %v104, %v346
    %v349 = vmax.f32 %v348, 0.0
    %v351 = vrot.slane %v349, 6
    %v352 = vsel %vm30, %v351, 0
    %354 = vmatprep.subr.mxu0 0.0
    %355 = vmatpush1.msra.mxu0 0.0
    %356 = vmatprep.subr.mxu0 0.0
    %357 = vmatpush1.msra.mxu0 0.0
    %358 = vmatprep.subr.mxu0 0.0
    %359 = vmatpush1.msra.mxu0 0.0
    %360 = vmatprep.subr.mxu0 0.0
    %361 = vmatpush1.msra.mxu0 0.0
    %362 = vmatprep.subr.mxu0 0.0
    %363 = vmatpush1.msra.mxu0 0.0
    %364 = vmatprep.subr.mxu0 0.0
    %365 = vmatpush1.msra.mxu0 0.0
    %366 = vmatprep.subr.mxu0 0.0
    %367 = vmatpush1.msra.mxu0 0.0
    %368 = vmatprep.subr.mxu0 0.0
    %369 = vmatpush1.msra.mxu0 0.0
    %370 = vmatprep.subr.mxu0 0.0
    %371 = vmatpush1.msra.mxu0 0.0
    %372 = vmatprep.subr.mxu0 0.0
    %373 = vmatpush1.msra.mxu0 0.0
    %374 = vmatprep.subr.mxu0 0.0
    %375 = vmatpush1.msra.mxu0 0.0
    %376 = vmatprep.subr.mxu0 0.0
    %377 = vmatpush1.msra.mxu0 0.0
    %378 = vmatprep.subr.mxu0 0.0
    %379 = vmatpush1.msra.mxu0 0.0
    %380 = vmatprep.subr.mxu0 0.0
    %381 = vmatpush1.msra.mxu0 0.0
    %382 = vmatprep.subr.mxu0 0.0
    %383 = vmatpush1.msra.mxu0 0.0
    %384 = vmatprep.subr.mxu0 0.0
    %385 = vmatpush1.msra.mxu0 %v112
    %386 = vmatprep.subr.mxu0 0.0
    %387 = vmatpush2.msra.mxu0 0.0
    %388 = vmatprep.subr.mxu0 0.0
    %389 = vmatpush2.msra.mxu0 0.0
    %390 = vmatprep.subr.mxu0 0.0
    %391 = vmatpush2.msra.mxu0 0.0
    %392 = vmatprep.subr.mxu0 0.0
    %393 = vmatpush2.msra.mxu0 0.0
    %394 = vmatprep.subr.mxu0 0.0
    %395 = vmatpush2.msra.mxu0 0.0
    %396 = vmatprep.subr.mxu0 0.0
    %397 = vmatpush2.msra.mxu0 0.0
    %398 = vmatprep.subr.mxu0 0.0
    %399 = vmatpush2.msra.mxu0 0.0
    %400 = vmatprep.subr.mxu0 0.0
    %401 = vmatpush2.msra.mxu0 0.0
    %402 = vmatprep.subr.mxu0 0.0
    %403 = vmatpush2.msra.mxu0 0.0
    %404 = vmatprep.subr.mxu0 0.0
    %405 = vmatpush2.msra.mxu0 0.0
    %406 = vmatprep.subr.mxu0 0.0
    %407 = vmatpush2.msra.mxu0 0.0
    %408 = vmatprep.subr.mxu0 0.0
    %409 = vmatpush2.msra.mxu0 0.0
    %410 = vmatprep.subr.mxu0 0.0
    %411 = vmatpush2.msra.mxu0 0.0
    %412 = vmatprep.subr.mxu0 0.0
    %413 = vmatpush2.msra.mxu0 0.0
    %414 = vmatprep.subr.mxu0 0.0
    %415 = vmatpush2.msra.mxu0 0.0
    %416 = vmatprep.subr.mxu0 0.0
    %417 = vmatpush2.msra.mxu0 0.0
    %418 = vmatprep.mubr.f32.mxu0 0.0
    %419 = vmatmul.mubr.f32.gmra.mxu0 %v352
    %v420 = vpop.f32.mrf.mxu0
    %v421 = vadd.f32 0.0, %v420
    %v422 = vpop.f32.mrf.mxu0
    %423 = vdwg.mxu0
    %v424 = vadd.f32 %v109, %v421
    %v425 = vmax.f32 %v424, 0.0
    %v427 = vsel %vm30, %v425, 0
    %429 = vmatprep.subr.mxu0 0.0
    %430 = vmatpush1.msra.mxu0 0.0
    %431 = vmatprep.subr.mxu0 0.0
    %432 = vmatpush1.msra.mxu0 0.0
    %433 = vmatprep.subr.mxu0 0.0
    %434 = vmatpush1.msra.mxu0 0.0
    %435 = vmatprep.subr.mxu0 0.0
    %436 = vmatpush1.msra.mxu0 0.0
    %437 = vmatprep.subr.mxu0 0.0
    %438 = vmatpush1.msra.mxu0 0.0
    %439 = vmatprep.subr.mxu0 0.0
    %440 = vmatpush1.msra.mxu0 0.0
    %441 = vmatprep.subr.mxu0 0.0
    %442 = vmatpush1.msra.mxu0 0.0
    %443 = vmatprep.subr.mxu0 0.0
    %444 = vmatpush1.msra.mxu0 0.0
    %445 = vmatprep.subr.mxu0 0.0
    %446 = vmatpush1.msra.mxu0 0.0
    %447 = vmatprep.subr.mxu0 0.0
    %448 = vmatpush1.msra.mxu0 0.0
    %449 = vmatprep.subr.mxu0 0.0
    %450 = vmatpush1.msra.mxu0 0.0
    %451 = vmatprep.subr.mxu0 0.0
    %452 = vmatpush1.msra.mxu0 0.0
    %453 = vmatprep.subr.mxu0 0.0
    %454 = vmatpush1.msra.mxu0 0.0
    %455 = vmatprep.subr.mxu0 0.0
    %456 = vmatpush1.msra.mxu0 0.0
    %457 = vmatprep.subr.mxu0 0.0
    %458 = vmatpush1.msra.mxu0 0.0
    %459 = vmatprep.subr.mxu0 0.0
    %460 = vmatpush1.msra.mxu0 %v112
    %461 = vmatprep.subr.mxu0 0.0
    %462 = vmatpush2.msra.mxu0 0.0
    %463 = vmatprep.subr.mxu0 0.0
    %464 = vmatpush2.msra.mxu0 0.0
    %465 = vmatprep.subr.mxu0 0.0
    %466 = vmatpush2.msra.mxu0 0.0
    %467 = vmatprep.subr.mxu0 0.0
    %468 = vmatpush2.msra.mxu0 0.0
    %469 = vmatprep.subr.mxu0 0.0
    %470 = vmatpush2.msra.mxu0 0.0
    %471 = vmatprep.subr.mxu0 0.0
    %472 = vmatpush2.msra.mxu0 0.0
    %473 = vmatprep.subr.mxu0 0.0
    %474 = vmatpush2.msra.mxu0 0.0
    %475 = vmatprep.subr.mxu0 0.0
    %476 = vmatpush2.msra.mxu0 0.0
    %477 = vmatprep.subr.mxu0 0.0
    %478 = vmatpush2.msra.mxu0 0.0
    %479 = vmatprep.subr.mxu0 0.0
    %480 = vmatpush2.msra.mxu0 0.0
    %481 = vmatprep.subr.mxu0 0.0
    %482 = vmatpush2.msra.mxu0 0.0
    %483 = vmatprep.subr.mxu0 0.0
    %484 = vmatpush2.msra.mxu0 0.0
    %485 = vmatprep.subr.mxu0 0.0
    %486 = vmatpush2.msra.mxu0 0.0
    %487 = vmatprep.subr.mxu0 0.0
    %488 = vmatpush2.msra.mxu0 0.0
    %489 = vmatprep.subr.mxu0 0.0
    %490 = vmatpush2.msra.mxu0 0.0
    %491 = vmatprep.subr.mxu0 0.0
    %492 = vmatpush2.msra.mxu0 0.0
    %493 = vmatprep.mubr.f32.mxu0 0.0
    %494 = vmatmul.mubr.f32.gmra.mxu0 %v427
    %v495 = vpop.f32.mrf.mxu0
    %v496 = vadd.f32 0.0, %v495
    %v497 = vpop.f32.mrf.mxu0
    %498 = vdwg.mxu0
    %v500 = vrot.slane %v496, 6
    %v502 = vadd.f32 %v109, %v500
    %v503 = vmax.f32 %v502, 0.0
    %v505 = vrot.slane %v503, 2
    %v506 = vsel %vm30, %v505, 0
    %508 = vmatprep.subr.mxu0 0.0
    %509 = vmatpush1.msra.mxu0 0.0
    %510 = vmatprep.subr.mxu0 0.0
    %511 = vmatpush1.msra.mxu0 0.0
    %512 = vmatprep.subr.mxu0 0.0
    %513 = vmatpush1.msra.mxu0 0.0
    %514 = vmatprep.subr.mxu0 0.0
    %515 = vmatpush1.msra.mxu0 0.0
    %516 = vmatprep.subr.mxu0 0.0
    %517 = vmatpush1.msra.mxu0 0.0
    %518 = vmatprep.subr.mxu0 0.0
    %519 = vmatpush1.msra.mxu0 0.0
    %520 = vmatprep.subr.mxu0 0.0
    %521 = vmatpush1.msra.mxu0 0.0
    %522 = vmatprep.subr.mxu0 0.0
    %523 = vmatpush1.msra.mxu0 0.0
    %524 = vmatprep.subr.mxu0 0.0
    %525 = vmatpush1.msra.mxu0 0.0
    %526 = vmatprep.subr.mxu0 0.0
    %527 = vmatpush1.msra.mxu0 0.0
    %528 = vmatprep.subr.mxu0 0.0
    %529 = vmatpush1.msra.mxu0 0.0
    %530 = vmatprep.subr.mxu0 0.0
    %531 = vmatpush1.msra.mxu0 0.0
    %532 = vmatprep.subr.mxu0 0.0
    %533 = vmatpush1.msra.mxu0 0.0
    %534 = vmatprep.subr.mxu0 0.0
    %535 = vmatpush1.msra.mxu0 0.0
    %536 = vmatprep.subr.mxu0 0.0
    %537 = vmatpush1.msra.mxu0 0.0
    %538 = vmatprep.subr.mxu0 0.0
    %539 = vmatpush1.msra.mxu0 %v112
    %540 = vmatprep.subr.mxu0 0.0
    %541 = vmatpush2.msra.mxu0 0.0
    %542 = vmatprep.subr.mxu0 0.0
    %543 = vmatpush2.msra.mxu0 0.0
    %544 = vmatprep.subr.mxu0 0.0
    %545 = vmatpush2.msra.mxu0 0.0
    %546 = vmatprep.subr.mxu0 0.0
    %547 = vmatpush2.msra.mxu0 0.0
    %548 = vmatprep.subr.mxu0 0.0
    %549 = vmatpush2.msra.mxu0 0.0
    %550 = vmatprep.subr.mxu0 0.0
    %551 = vmatpush2.msra.mxu0 0.0
    %552 = vmatprep.subr.mxu0 0.0
    %553 = vmatpush2.msra.mxu0 0.0
    %554 = vmatprep.subr.mxu0 0.0
    %555 = vmatpush2.msra.mxu0 0.0
    %556 = vmatprep.subr.mxu0 0.0
    %557 = vmatpush2.msra.mxu0 0.0
    %558 = vmatprep.subr.mxu0 0.0
    %559 = vmatpush2.msra.mxu0 0.0
    %560 = vmatprep.subr.mxu0 0.0
    %561 = vmatpush2.msra.mxu0 0.0
    %562 = vmatprep.subr.mxu0 0.0
    %563 = vmatpush2.msra.mxu0 0.0
    %564 = vmatprep.subr.mxu0 0.0
    %565 = vmatpush2.msra.mxu0 0.0
    %566 = vmatprep.subr.mxu0 0.0
    %567 = vmatpush2.msra.mxu0 0.0
    %568 = vmatprep.subr.mxu0 0.0
    %569 = vmatpush2.msra.mxu0 0.0
    %570 = vmatprep.subr.mxu0 0.0
    %571 = vmatpush2.msra.mxu0 0.0
    %572 = vmatprep.mubr.f32.mxu0 0.0
    %573 = vmatmul.mubr.f32.gmra.mxu0 %v506
    %v574 = vpop.f32.mrf.mxu0
    %v575 = vadd.f32 0.0, %v574
    %v576 = vpop.f32.mrf.mxu0
    %577 = vdwg.mxu0
    %v579 = vrot.slane %v575, 4
    %v581 = vadd.f32 %v109, %v579
    %v582 = vmax.f32 %v581, 0.0
    %v584 = vrot.slane %v582, 4
    %v585 = vsel %vm30, %v584, 0
    %587 = vmatprep.subr.mxu0 0.0
    %588 = vmatpush1.msra.mxu0 0.0
    %589 = vmatprep.subr.mxu0 0.0
    %590 = vmatpush1.msra.mxu0 0.0
    %591 = vmatprep.subr.mxu0 0.0
    %592 = vmatpush1.msra.mxu0 0.0
    %593 = vmatprep.subr.mxu0 0.0
    %594 = vmatpush1.msra.mxu0 0.0
    %595 = vmatprep.subr.mxu0 0.0
    %596 = vmatpush1.msra.mxu0 0.0
    %597 = vmatprep.subr.mxu0 0.0
    %598 = vmatpush1.msra.mxu0 0.0
    %599 = vmatprep.subr.mxu0 0.0
    %600 = vmatpush1.msra.mxu0 0.0
    %601 = vmatprep.subr.mxu0 0.0
    %602 = vmatpush1.msra.mxu0 0.0
    %603 = vmatprep.subr.mxu0 0.0
    %604 = vmatpush1.msra.mxu0 0.0
    %605 = vmatprep.subr.mxu0 0.0
    %606 = vmatpush1.msra.mxu0 0.0
    %607 = vmatprep.subr.mxu0 0.0
    %608 = vmatpush1.msra.mxu0 0.0
    %609 = vmatprep.subr.mxu0 0.0
    %610 = vmatpush1.msra.mxu0 0.0
    %611 = vmatprep.subr.mxu0 0.0
    %612 = vmatpush1.msra.mxu0 0.0
    %613 = vmatprep.subr.mxu0 0.0
    %614 = vmatpush1.msra.mxu0 0.0
    %615 = vmatprep.subr.mxu0 0.0
    %616 = vmatpush1.msra.mxu0 0.0
    %617 = vmatprep.subr.mxu0 0.0
    %618 = vmatpush1.msra.mxu0 %v112
    %619 = vmatprep.subr.mxu0 0.0
    %620 = vmatpush2.msra.mxu0 0.0
    %621 = vmatprep.subr.mxu0 0.0
    %622 = vmatpush2.msra.mxu0 0.0
    %623 = vmatprep.subr.mxu0 0.0
    %624 = vmatpush2.msra.mxu0 0.0
    %625 = vmatprep.subr.mxu0 0.0
    %626 = vmatpush2.msra.mxu0 0.0
    %627 = vmatprep.subr.mxu0 0.0
    %628 = vmatpush2.msra.mxu0 0.0
    %629 = vmatprep.subr.mxu0 0.0
    %630 = vmatpush2.msra.mxu0 0.0
    %631 = vmatprep.subr.mxu0 0.0
    %632 = vmatpush2.msra.mxu0 0.0
    %633 = vmatprep.subr.mxu0 0.0
    %634 = vmatpush2.msra.mxu0 0.0
    %635 = vmatprep.subr.mxu0 0.0
    %636 = vmatpush2.msra.mxu0 0.0
    %637 = vmatprep.subr.mxu0 0.0
    %638 = vmatpush2.msra.mxu0 0.0
    %639 = vmatprep.subr.mxu0 0.0
    %640 = vmatpush2.msra.mxu0 0.0
    %641 = vmatprep.subr.mxu0 0.0
    %642 = vmatpush2.msra.mxu0 0.0
    %643 = vmatprep.subr.mxu0 0.0
    %644 = vmatpush2.msra.mxu0 0.0
    %645 = vmatprep.subr.mxu0 0.0
    %646 = vmatpush2.msra.mxu0 0.0
    %647 = vmatprep.subr.mxu0 0.0
    %648 = vmatpush2.msra.mxu0 0.0
    %649 = vmatprep.subr.mxu0 0.0
    %650 = vmatpush2.msra.mxu0 0.0
    %651 = vmatprep.mubr.f32.mxu0 0.0
    %652 = vmatmul.mubr.f32.gmra.mxu0 %v585
    %v653 = vpop.f32.mrf.mxu0
    %v654 = vadd.f32 0.0, %v653
    %v655 = vpop.f32.mrf.mxu0
    %656 = vdwg.mxu0
    %v658 = vrot.slane %v654, 2
    %v660 = vadd.f32 %v109, %v658
    %v661 = vmax.f32 %v660, 0.0
    %v663 = vrot.slane %v661, 6
    %vm665 = vcmask 31744
    %v666 = vsel %vm665, %v113, %v663
    %v667 = vrot.slane %v582, 2
    %v669 = vsel %vm665, %v191, %v667
    %v670 = vrot.slane %v503, 6
    %v672 = vsel %vm665, %v270, %v670
    %v673 = vrot.slane %v425, 2
    %v675 = vsel %vm665, %v349, %v673
    %v677 = vsel %vm665, %v425, %v351
    %v678 = vrot.slane %v270, 2
    %v680 = vsel %vm665, %v503, %v678
    %v681 = vrot.slane %v191, 6
    %v683 = vsel %vm665, %v582, %v681
    %v684 = vrot.slane %v113, 2
    %v686 = vsel %vm665, %v661, %v684
    %vm687 = vcmask 1041408
    %v688 = vsel %vm687, %v666, %v669
    %vm689 = vcmask 1043456
    %v690 = vsel %vm689, %v688, %v672
    %vm691 = vcmask 1045504
    %v692 = vsel %vm691, %v690, %v675
    %v693 = vsel %vm687, %v677, %v680
    %v694 = vsel %vm689, %v693, %v683
    %v695 = vsel %vm691, %v694, %v686
    %696 = vst.msk [vmem:[%s4] sm:$0xff] %vm30, %v692
    %697 = vst.msk [vmem:[%s4 + $0x8] sm:$0xff] %vm30, %v695
    %v698 = vrot.slane %v661, 4
    %699 = vrot.lane.b32.xlu0 %v698, 124
    %v700 = vpop.permute.xlu0 %699
    %v702 = vsel %vm687, %v663, %v700
    %vm703 = vcmask 27648
    %704 = vst.msk [vmem:[#allocation2] sm:$0xf] %vm703, %v702
    // Predicated region
    $region18: #{tpu_custom_call.1} parent=1 // pred_check
      _
    $region19: #{tpu_custom_call.1} parent=1 // pred_check_branch
      %706 = sbr.rel (0) target = $region21
    $region20: #{tpu_custom_call.1} parent=1 // pred_region
      _
    $region21: #{tpu_custom_call.1} parent=1 // pred_fallthru
      _
    // Predicated region
    $region22: #{tpu_custom_call.1} parent=1 // pred_check
      _
    $region23: #{tpu_custom_call.1} parent=1 // pred_check_branch
      %708 = sbr.rel (0) target = $region25
    $region24: #{tpu_custom_call.1} parent=1 // pred_region
      %s710 = ssub.s32 64, 64
      %711 = vsyncadd [#allocation3], %s710
      %s713 = sshll.u32 [#allocation2], 4
      %s714 = int_to_ptr.vmem [resolvable:$true] %s713
      %716 = dma.vmem_to_hbm [thread:$0]  %s714, 64, %s5, [#allocation3]
    $region25: #{tpu_custom_call.1} parent=1 // pred_fallthru
      _
    // Predicated region
    $region26: #{tpu_custom_call.1} parent=1 // pred_check
      _
    $region27: #{tpu_custom_call.1} parent=1 // pred_check_branch
      %718 = sbr.rel (0) target = $region29
    $region28: #{tpu_custom_call.1} parent=1 // pred_region
      _
    $region29: #{tpu_custom_call.1} parent=1 // pred_fallthru
      _
    // Predicated region
    $region30: #{tpu_custom_call.1} parent=1 // pred_check
      _
    $region31: #{tpu_custom_call.1} parent=1 // pred_check_branch
      %720 = sbr.rel (0) target = $region33
    $region32: #{tpu_custom_call.1} parent=1 // pred_region
      %721 = dma.done [#allocation3], 64
    $region33: #{tpu_custom_call.1} parent=1 // pred_fallthru
      _
    %722 = vsyncpa [#allocation3], 1

</llo_original>
